<compile_context>
chip_gen: v5e
topology: v5e:2x2
jax: 0.10.0
libtpu: 0.0.40
codegen_flags: <defaults>
</compile_context>

<pallas_src>
from functools import partial

import jax
import jax.numpy as jnp
from jax.experimental import pallas as pl
from jax.experimental.pallas import tpu as pltpu


# ----------------------------------------------------------------------------
# Pallas kernel: out[:, :, s_tile] = op(x, W^T @ modulation + b)
# ----------------------------------------------------------------------------
def _modulation_kernel(x_ref, m_ref, wt_ref, b_ref, o_ref, *, op, compute_dtype):
    # x_ref: (1, Cx, TS)   m_ref: (1, Cm, TS)   wt_ref: (Cx, Cm)   b_ref: (Cx, 1)
    m = m_ref[0]
    w = wt_ref[...]
    if m.dtype != w.dtype:
        cd = jnp.promote_types(m.dtype, w.dtype)
        m = m.astype(cd)
        w = w.astype(cd)
    # Tiny contraction (Cm) on the MXU; the kernel is HBM-bandwidth bound, so
    # MXU utilization is irrelevant here (do NOT pad Cm/Cx).
    proj = jnp.dot(w, m, preferred_element_type=jnp.float32)
    proj = (proj + b_ref[...].astype(jnp.float32)).astype(compute_dtype)
    x = x_ref[0].astype(compute_dtype)
    if op == "add":
        out = x + proj
    elif op == "mul":
        out = x * proj
    else:
        raise ValueError(f"unsupported op: {op}")
    o_ref[0] = out.astype(o_ref.dtype)


# ----------------------------------------------------------------------------
# Generation-aware tiling helpers
# ----------------------------------------------------------------------------
def _cdiv(a, b):
    return -(-a // b)


def _vmem_capacity_bytes():
    """Physical per-core VMEM (v5e/v6e: 128 MiB, v7x: 64 MiB); conservative
    v7x-safe fallback if the query is unavailable."""
    try:
        return int(pltpu.get_tpu_info().vmem_capacity_bytes)
    except Exception:
        return 64 << 20


def _snap_tile(S, max_cols):
    """Largest spatial tile <= max_cols that is a multiple of 128, preferring
    exact divisors of S (so there is no padded tail block / dead DMA)."""
    max_cols = min(S, max_cols)
    if max_cols >= S:
        return S
    base = max(128, (max_cols // 128) * 128)
    n0 = _cdiv(S, base)
    for n in range(n0, n0 + 64):  # cheap scan for a 128-aligned exact divisor
        if S % n == 0 and (S // n) % 128 == 0:
            return S // n
    return base


def _pick_tile_s(S, bytes_per_col, budget_bytes, batch, min_total_steps=4):
    """Largest lane-dense spatial tile whose streamed + in-kernel working set
    fits the VMEM budget, with a cap that keeps >= min_total_steps grid steps
    (>= 2 per v7x TensorCore) when the problem is big enough to benefit."""
    if S <= 128:
        return S  # full-axis block (allowed even when not a multiple of 128)
    max_cols = max(128, budget_bytes // max(bytes_per_col, 1))
    tile = S if S <= max_cols else _snap_tile(S, max_cols)
    # Megacore / 2-TC sharding needs multiple grid steps.  Only split further
    # if each resulting tile still moves a healthy (>= ~1 MiB) slab, so tiny
    # problems stay single-block (per-step overhead would dominate otherwise).
    if batch * _cdiv(S, tile) < min_total_steps:
        want_tiles = _cdiv(min_total_steps, batch)
        cand = _snap_tile(S, _cdiv(S, want_tiles))
        if cand >= 128 and cand * bytes_per_col >= (1 << 20):
            tile = cand
    return tile


# ----------------------------------------------------------------------------
# Host wrapper
# ----------------------------------------------------------------------------
def modulation_apply(x_nchw, mod_nchw, weight, bias, *, op):
    """out = op(x, conv1x1(modulation)) via a Pallas TPU kernel, NCHW in / NCHW out.

    x_nchw:   (B, Cx, H, W)
    mod_nchw: (B, Cm, H, W)
    weight:   (Cm, Cx)   1x1-conv kernel in channels-last matmul form
    bias:     (Cx,)

    The matmul accumulates in f32.  When x is bf16 the elementwise op runs in
    bf16 (fine on v6e/v7x; on v5e Mosaic legalizes it — correctness is
    unaffected, only storage precision).  Output dtype follows x's dtype.
    """
    B, Cx, H, W = x_nchw.shape
    Bm, Cm, Hm, Wm = mod_nchw.shape
    assert (B, H, W) == (Bm, Hm, Wm), "x / modulation batch-spatial mismatch"
    assert weight.shape == (Cm, Cx) and bias.shape == (Cx,)

    S = H * W
    # Free reshapes only: channels stay where they are, spatial (contiguous in
    # NCHW) lands on the lane axis.  No transpose HBM round-trips.
    x3 = x_nchw.reshape(B, Cx, S)
    m3 = mod_nchw.reshape(B, Cm, S)
    wt = weight.T                       # (Cx, Cm) -- tiny, resident in VMEM
    b2 = bias.reshape(Cx, 1)

    # Elementwise compute dtype: f32 stays f32; bf16 stays bf16 (matmul still
    # accumulates f32). TODO(synk): force f32 here on v5e if profiling shows
    # the legalized-bf16 VALU path regressing.
    compute_dtype = jnp.float32 if x3.dtype == jnp.float32 else x3.dtype
    citem = jnp.dtype(compute_dtype).itemsize

    # Per-spatial-column working set:
    #   streamed (double-buffered by the pipeline): x tile + mod tile + out tile
    #   in-kernel intermediates: f32 proj (Cx), compute-dtype x/result (2*Cx),
    #   plus the promoted modulation operand for the matmul.
    stream_per_col = 2 * (
        Cx * x3.dtype.itemsize + Cm * m3.dtype.itemsize + Cx * x3.dtype.itemsize
    )
    scratch_per_col = Cx * 4 + 2 * Cx * citem + Cm * 4
    bytes_per_col = stream_per_col + scratch_per_col

    # Generation-aware VMEM budget: ~72% of physical VMEM for the streaming
    # working set (v5e/v6e 128 MiB -> ~92 MiB, v7x 64 MiB -> ~46 MiB), leaving
    # headroom for Mosaic internal scratch and the resident weight/bias.
    vmem_cap = _vmem_capacity_bytes()
    budget = int(vmem_cap * 0.72)

    tile_s = _pick_tile_s(S, bytes_per_col, budget, B)
    # pl.cdiv grid: a non-dividing S (only when no exact divisor fits the
    # budget) gets a padded tail block — OOB reads padded, OOB writes dropped.
    grid = (B, pl.cdiv(S, tile_s))

    # Scoped-VMEM ceiling consistent with the tile picker (+ headroom), always
    # capped at physical capacity.
    resident = 2 * (wt.size * wt.dtype.itemsize + b2.size * b2.dtype.itemsize)
    est_bytes = tile_s * bytes_per_col + resident
    vmem_limit = int(min(vmem_cap, max(est_bytes + (8 << 20), 32 << 20)))

    out3 = pl.pallas_call(
        partial(_modulation_kernel, op=op, compute_dtype=compute_dtype),
        out_shape=jax.ShapeDtypeStruct((B, Cx, S), x3.dtype),
        grid_spec=pltpu.PrefetchScalarGridSpec(
            num_scalar_prefetch=0,
            grid=grid,
            in_specs=[
                pl.BlockSpec((1, Cx, tile_s), lambda b, s: (b, 0, s)),  # x
                pl.BlockSpec((1, Cm, tile_s), lambda b, s: (b, 0, s)),  # modulation
                pl.BlockSpec((Cx, Cm), lambda b, s: (0, 0)),            # W^T (resident)
                pl.BlockSpec((Cx, 1), lambda b, s: (0, 0)),             # bias (resident)
            ],
            out_specs=pl.BlockSpec((1, Cx, tile_s), lambda b, s: (b, 0, s)),
        ),
        compiler_params=pltpu.CompilerParams(
            # Both grid axes are independent -> megacore/2-TC sharding on v7x.
            dimension_semantics=("parallel", "parallel"),
            vmem_limit_bytes=vmem_limit,
        ),
    )(x3, m3, wt, b2)

    return out3.reshape(B, Cx, H, W)


# ----------------------------------------------------------------------------
# ModulationWrapper (JAX port; control flow is Python glue, compute is Pallas)
# ----------------------------------------------------------------------------
class ModulationWrapper:
    def __init__(
        self,
        modulations,            # list over layers of 4D (B,Cm,H,W) or 5D (T,B,Cm,H,W) arrays
        proj_weights,           # list over layers of (Cm, Cx) 1x1-conv weights
        proj_biases,            # list over layers of (Cx,) biases
        modulation_timestep,    # 'same' or an index
        apply_timestep,         # 'all' or an int timestep
        num_steps,
        op,                     # 'add' | 'mul'
        modulation_from_all_layers=False,
    ):
        self.proj_weights = proj_weights
        self.proj_biases = proj_biases
        self.modulation_timestep = modulation_timestep
        self.apply_timestep = apply_timestep
        self.op = op

        num_layers = len(proj_weights)
        modulations = list(modulations)
        for i in range(num_layers):
            if modulations[i].ndim == 4:
                if num_steps is None or num_steps < 1:
                    raise ValueError(
                        "If x is 4D, num_steps must be provided and greater than 0"
                    )
                modulations[i] = jnp.broadcast_to(
                    modulations[i][None], (num_steps,) + modulations[i].shape
                )
            elif modulations[i].ndim == 5:
                if num_steps is not None and num_steps != modulations[i].shape[0]:
                    raise ValueError(
                        "If x is 5D and num_steps is provided, it must match the "
                        "sequence length."
                    )
                num_steps = modulations[i].shape[0]
            else:
                raise ValueError(
                    "The input must be a 4D tensor or a 5D tensor with sequence length."
                )

        if modulation_from_all_layers:
            # TODO(synk): modulation_from_all_layers=True path (per-layer
            # upsample + channel concat) not ported — the reference code's
            # `[[] * num_steps ...]` list init is itself broken.
            raise NotImplementedError("modulation_from_all_layers=True not supported")

        self.modulations = modulations

    def forward(self, x, i, t):
        if t == "all" or t == self.apply_timestep:
            if self.modulation_timestep == "same":
                modulation = self.modulations[i][t]
            else:
                # Faithful to reference: indexes the per-LAYER list by the
                # timestep id (almost certainly an upstream logic bug; flagged).
                modulation = self.modulations[self.modulation_timestep]
            # use_cache is a pure perf optimization in the original module
            # (it reuses the previous projection of the same modulation);
            # results are numerically identical, so we recompute.
            # TODO(synk): no stateful projection cache in this stateless port;
            # callers processing many timesteps of the same layer should batch
            # them into one call (stack on the batch axis) to amortize launches.
            _use_cache = (t != "all") and (t > 0) and (t != self.apply_timestep)
            return modulation_apply(
                x,
                modulation,
                self.proj_weights[i],
                self.proj_biases[i],
                op=self.op,
            )
        return x

    __call__ = forward


# ----------------------------------------------------------------------------
# Demo / self-check
# ----------------------------------------------------------------------------
if __name__ == "__main__":
    key = jax.random.PRNGKey(0)
    B, Cx, Cm, H, W = 2, 32, 8, 16, 16
    num_steps = 3
    num_layers = 2

    keys = jax.random.split(key, 3 + 2 * num_layers)
    x = jax.random.normal(keys[0], (B, Cx, H, W), dtype=jnp.float32)

    # Per-layer 4D modulations (expanded to T inside the wrapper, like the reference).
    modulations = [
        jax.random.normal(keys[1 + l], (B, Cm, H, W), dtype=jnp.float32)
        for l in range(num_layers)
    ]
    # Deterministic synthetic parameters for the modulation projection (1x1 conv).
    proj_weights = [
        0.05 * jax.random.normal(keys[1 + num_layers + l], (Cm, Cx), dtype=jnp.float32)
        for l in range(num_layers)
    ]
    proj_biases = [
        jnp.full((Cx,), 1.0 + 0.1 * l, dtype=jnp.float32) for l in range(num_layers)
    ]

    wrapper = ModulationWrapper(
        modulations=modulations,
        proj_weights=proj_weights,
        proj_biases=proj_biases,
        modulation_timestep="same",
        apply_timestep=1,
        num_steps=num_steps,
        op="mul",
    )

    layer_i, t = 0, 1  # t == apply_timestep -> modulation path runs
    out = wrapper(x, layer_i, t)
    out = jax.block_until_ready(out)

    # Pure-JAX reference for the same path.
    mod = wrapper.modulations[layer_i][t]                      # (B, Cm, H, W)
    proj = jnp.einsum("bchw,cd->bdhw", mod, proj_weights[layer_i]) + proj_biases[
        layer_i
    ].reshape(1, Cx, 1, 1)
    ref = x * proj
    assert out.shape == x.shape and out.dtype == x.dtype
    assert jnp.allclose(out, ref, atol=1e-5, rtol=1e-5), "mismatch vs reference"

    # Non-applied timestep returns x unchanged (identity path).
    passthrough = jax.block_until_ready(wrapper(x, layer_i, 2))
    assert jnp.array_equal(passthrough, x)

    # bf16 storage path (halves HBM traffic; matmul still accumulates f32).
    x_bf = x.astype(jnp.bfloat16)
    mod_bf = mod.astype(jnp.bfloat16)
    out_bf = jax.block_until_ready(
        modulation_apply(x_bf, mod_bf, proj_weights[layer_i], proj_biases[layer_i], op="mul")
    )
    ref_bf = x_bf.astype(jnp.float32) * (
        jnp.einsum("bchw,cd->bdhw", mod_bf.astype(jnp.float32), proj_weights[layer_i])
        + proj_biases[layer_i].reshape(1, Cx, 1, 1)
    )
    assert out_bf.dtype == jnp.bfloat16
    assert jnp.allclose(
        out_bf.astype(jnp.float32), ref_bf, atol=6e-2, rtol=6e-2
    ), "bf16 mismatch vs reference"

    print("KERNEL_OK")
</pallas_src>

<mosaic_0001>
module attributes {stable_mosaic.version = 11 : i64} {
  func.func @_modulation_kernel(%arg0: i32, %arg1: i32, %arg2: memref<1x32x256xf32, #tpu.memory_space<vmem>>, %arg3: memref<1x8x256xf32, #tpu.memory_space<vmem>>, %arg4: memref<32x8xf32, #tpu.memory_space<vmem>>, %arg5: memref<32x1xf32, #tpu.memory_space<vmem>>, %arg6: memref<1x32x256xf32, #tpu.memory_space<vmem>>) attributes {dimension_semantics = [#tpu.dimension_semantics<parallel>, #tpu.dimension_semantics<parallel>], iteration_bounds = array<i64: 2, 1>, scalar_prefetch = 0 : i64, scratch_operands = 0 : i64, tpu.core_type = #tpu.core_type<tc>, window_params = [{transform_indices = @transform_0, window_bounds = array<i64: 1, 32, 256>}, {transform_indices = @transform_1, window_bounds = array<i64: 1, 8, 256>}, {pipeline_mode = #tpu.pipeline_mode<synchronous>, transform_indices = @transform_2, window_bounds = array<i64: 32, 8>}, {pipeline_mode = #tpu.pipeline_mode<synchronous>, transform_indices = @transform_3, window_bounds = array<i64: 32, 1>}, {transform_indices = @transform_4, window_bounds = array<i64: 1, 32, 256>}]} {
    %c0 = arith.constant 0 : index
    %c0_0 = arith.constant 0 : index
    %c0_1 = arith.constant 0 : index
    %0 = vector.load %arg3[%c0, %c0_0, %c0_1] : memref<1x8x256xf32, #tpu.memory_space<vmem>>, vector<1x8x256xf32>
    %1 = vector.shape_cast %0 : vector<1x8x256xf32> to vector<8x256xf32>
    %c0_2 = arith.constant 0 : index
    %c0_3 = arith.constant 0 : index
    %2 = vector.load %arg4[%c0_2, %c0_3] : memref<32x8xf32, #tpu.memory_space<vmem>>, vector<32x8xf32>
    %cst = arith.constant dense<0.000000e+00> : vector<32x256xf32>
    %3 = tpu.matmul %2, %1, %cst {dimension_numbers = #tpu.dot_dimension_numbers<[1], [0], [0], [1], [0, 0, 1, 1], [], []>} : vector<32x8xf32>, vector<8x256xf32>, vector<32x256xf32> -> vector<32x256xf32>
    %c0_4 = arith.constant 0 : index
    %c0_5 = arith.constant 0 : index
    %4 = vector.load %arg5[%c0_4, %c0_5] : memref<32x1xf32, #tpu.memory_space<vmem>>, vector<32x1xf32>
    %5 = vector.broadcast %4 : vector<32x1xf32> to vector<32x256xf32>
    %6 = arith.addf %3, %5 : vector<32x256xf32>
    %c0_6 = arith.constant 0 : index
    %c0_7 = arith.constant 0 : index
    %c0_8 = arith.constant 0 : index
    %7 = vector.load %arg2[%c0_6, %c0_7, %c0_8] : memref<1x32x256xf32, #tpu.memory_space<vmem>>, vector<1x32x256xf32>
    %8 = vector.shape_cast %7 : vector<1x32x256xf32> to vector<32x256xf32>
    %9 = arith.mulf %8, %6 : vector<32x256xf32>
    %c0_9 = arith.constant 0 : index
    %c0_10 = arith.constant 0 : index
    %c0_11 = arith.constant 0 : index
    %10 = vector.load %arg6[%c0_9, %c0_10, %c0_11] : memref<1x32x256xf32, #tpu.memory_space<vmem>>, vector<1x32x256xf32>
    %11 = vector.shape_cast %10 : vector<1x32x256xf32> to vector<32x256xf32>
    %12 = vector.shape_cast %9 : vector<32x256xf32> to vector<1x32x256xf32>
    tpu.vector_store %arg6[%c0_9, %c0_10, %c0_11], %12 {strides = array<i32>} : memref<1x32x256xf32, #tpu.memory_space<vmem>>, vector<1x32x256xf32>,
    return
  }
  func.func @transform_0(%arg0: i32, %arg1: i32) -> (i32, i32, i32) {
    %c0_i32 = arith.constant 0 : i32
    %c0_i32_0 = arith.constant 0 : i32
    return %arg0, %c0_i32, %arg1 : i32, i32, i32
  }
  func.func @transform_1(%arg0: i32, %arg1: i32) -> (i32, i32, i32) {
    %c0_i32 = arith.constant 0 : i32
    %c0_i32_0 = arith.constant 0 : i32
    return %arg0, %c0_i32, %arg1 : i32, i32, i32
  }
  func.func @transform_2(%arg0: i32, %arg1: i32) -> (i32, i32) {
    %c0_i32 = arith.constant 0 : i32
    %c0_i32_0 = arith.constant 0 : i32
    %c0_i32_1 = arith.constant 0 : i32
    return %c0_i32, %c0_i32_0 : i32, i32
  }
  func.func @transform_3(%arg0: i32, %arg1: i32) -> (i32, i32) {
    %c0_i32 = arith.constant 0 : i32
    %c0_i32_0 = arith.constant 0 : i32
    %c0_i32_1 = arith.constant 0 : i32
    return %c0_i32, %c0_i32_0 : i32, i32
  }
  func.func @transform_4(%arg0: i32, %arg1: i32) -> (i32, i32, i32) {
    %c0_i32 = arith.constant 0 : i32
    %c0_i32_0 = arith.constant 0 : i32
    return %arg0, %c0_i32, %arg1 : i32, i32, i32
  }
}

</mosaic_0001>

<llo_original>
// kernel: tpu_custom_call.1
$region0: #{tpu_custom_call.1}
  #allocation0 [shape = 'u32[]', space=smem, size = 0x4, offset = 0x4, fixed_abs, tag = 'smem constant byte address 0x4 - core index']
  #allocation1 [shape = 'u32[72,128]{1,0:T(1,128)}', space=vmem, size = 0x9000, scoped, tag = 'internal scratch']
  %s0 = inlined_call_operand.hbm [shape: f32[2,32,256], index: 0, kind: input, shape index: {}]
  %s1 = inlined_call_operand.vmem [shape: f32[2,8,256], index: 1, kind: input, shape index: {}]
  %s2 = inlined_call_operand.vmem [shape: f32[32,8], index: 2, kind: input, shape index: {}]
  %s3 = inlined_call_operand.vmem [shape: f32[32,1], index: 3, kind: input, shape index: {}]
  %s4 = inlined_call_operand.hbm [shape: f32[2,32,256], index: 4, kind: output, shape index: {}]
  %s5 = sld [smem:[#allocation0]]
  $region53: #{tpu_custom_call.1} parent=0
    _
  %s7 = ssub.s32 1, %s5
  %s8 = scalar_select 0, %s7, %s5
  $region1: #{tpu_custom_call.1} parent=0
    #allocation2 [shape = 'u8[65536]{0}', space=vmem, size = 0x10000, scoped, tag = 'input window, operand 0']
    #allocation3 [shape = 's32[2]{0}', space=sflag, size = 0x8, scoped, tag = 'scoped memory for tpu_custom_call.1']
    #allocation4 [shape = 's32[2]{0}', space=sflag, size = 0x8, scoped, tag = 'scoped memory for tpu_custom_call.1']
    #allocation5 [shape = 'u8[65536]{0}', space=vmem, size = 0x10000, scoped, tag = 'output window, operand 0']
    %9 = vsyncpa [#allocation3], 0
    %s10 = scalar_lea.sflag [#allocation3], 1
    %11 = vsyncpa %s10, 0
    %12 = vsyncpa [#allocation4], 0
    %s13 = scalar_lea.sflag [#allocation4], 1
    %14 = vsyncpa %s13, 0
    loop: start=0, step=1, limit=4
    $region2: #{tpu_custom_call.1} parent=1 // loop_pre_header
      _
    $region3: #{tpu_custom_call.1} parent=1 // loop_header
      %s16 = sphi 0, %s20
      %p17 = scmp.ge.s32.totalorder %s16, 4
      %s23 = sphi 0, %s35
      %s24 = sphi 0, %s31
      %s25 = sphi 0, %s23
      %s26 = sphi 0, %s24
      %s27 = sphi 0, %s25
      %s28 = sphi 0, %s26
      %s40 = sphi 0, %s42
      %s43 = sphi 0, %s40
      %s44 = sphi 0, %s43
      %s60 = sphi 0, %s44
      %s68 = sphi 0, %s70
      %s71 = sphi 0, %s68
      %s72 = sphi 0, %s71
      %s88 = sphi 0, %s72
      %s92 = sphi 0, %s92
      %s94 = sphi 0, %s92
      %s95 = sphi 0, %s94
      %s109 = sphi 0, %s95
      %s113 = sphi 0, %s113
      %s115 = sphi 0, %s113
      %s116 = sphi 0, %s115
      %s130 = sphi 0, %s116
      %s138 = sphi 0, %s140
      %s141 = sphi 0, %s138
      %s142 = sphi 0, %s141
      %s158 = sphi 0, %s142
    $region4: #{tpu_custom_call.1} parent=1 // loop_header_branch
      %19 = sbr.rel (%p17) target = $region8
    $region5: #{tpu_custom_call.1} parent=1 // loop_body
      %s21 = ssub.s32 %s16, 1
      %s22 = ssub.s32 %s16, 2
      %s29 = sadd.s32 1, %s24
      %p30 = scmp.ge.s32.totalorder %s29, 1
      %s31 = scalar_select %p30, 0, %s29
      %s32 = sadd.s32 1, %s23
      %s33 = scalar_select %p30, %s32, %s23
      %p34 = scmp.ge.s32.totalorder %s33, 2
      %s35 = scalar_select %p34, 0, %s33
      %s36 = ssub.s32 %s23, %s35
      %s37 = ssub.s32 %s24, %s31
      %s38 = sor.u32 %s36, %s37
      %p39 = scmp.eq.s32.totalorder %s38, 0
      %s41 = sadd.s32 %s40, 1
      %s42 = scalar_select %p39, %s40, %s41
      %p45 = pneg %p39
      %p46 = scmp.eq.s32.totalorder %s16, 1
      %p47 = por %p45, %p46
      %p48 = scmp.ne.s32.totalorder %s40, %s43
      %p49 = scmp.eq.s32.totalorder %s16, 0
      %p50 = por %p48, %p49
      %p51 = scmp.ne.s32.totalorder %s40, %s43
      %p52 = scmp.eq.s32.totalorder %s21, 1
      %p53 = por %p51, %p52
      %p54 = scmp.ne.s32.totalorder %s43, %s44
      %p55 = scmp.eq.s32.totalorder %s21, 0
      %p56 = por %p54, %p55
      %p57 = scmp.ne.s32.totalorder %s43, %s44
      %p58 = scmp.eq.s32.totalorder %s22, 1
      %p59 = por %p57, %p58
      %p61 = scmp.ne.s32.totalorder %s44, %s60
      %p62 = scmp.eq.s32.totalorder %s22, 0
      %p63 = por %p61, %p62
      %s64 = ssub.s32 %s23, %s35
      %s65 = ssub.s32 %s24, %s31
      %s66 = sor.u32 %s64, %s65
      %p67 = scmp.eq.s32.totalorder %s66, 0
      %s69 = sadd.s32 %s68, 1
      %s70 = scalar_select %p67, %s68, %s69
      %p73 = pneg %p67
      %p74 = scmp.eq.s32.totalorder %s16, 1
      %p75 = por %p73, %p74
      %p76 = scmp.ne.s32.totalorder %s68, %s71
      %p77 = scmp.eq.s32.totalorder %s16, 0
      %p78 = por %p76, %p77
      %p79 = scmp.ne.s32.totalorder %s68, %s71
      %p80 = scmp.eq.s32.totalorder %s21, 1
      %p81 = por %p79, %p80
      %p82 = scmp.ne.s32.totalorder %s71, %s72
      %p83 = scmp.eq.s32.totalorder %s21, 0
      %p84 = por %p82, %p83
      %p85 = scmp.ne.s32.totalorder %s71, %s72
      %p86 = scmp.eq.s32.totalorder %s22, 1
      %p87 = por %p85, %p86
      %p89 = scmp.ne.s32.totalorder %s72, %s88
      %p90 = scmp.eq.s32.totalorder %s22, 0
      %p91 = por %p89, %p90
      %s93 = sadd.s32 %s92, 1
      %p96 = scmp.eq.s32.totalorder %s16, 1
      %p97 = scmp.ne.s32.totalorder %s92, %s94
      %p98 = scmp.eq.s32.totalorder %s16, 0
      %p99 = por %p97, %p98
      %p100 = scmp.ne.s32.totalorder %s92, %s94
      %p101 = scmp.eq.s32.totalorder %s21, 1
      %p102 = por %p100, %p101
      %p103 = scmp.ne.s32.totalorder %s94, %s95
      %p104 = scmp.eq.s32.totalorder %s21, 0
      %p105 = por %p103, %p104
      %p106 = scmp.ne.s32.totalorder %s94, %s95
      %p107 = scmp.eq.s32.totalorder %s22, 1
      %p108 = por %p106, %p107
      %p110 = scmp.ne.s32.totalorder %s95, %s109
      %p111 = scmp.eq.s32.totalorder %s22, 0
      %p112 = por %p110, %p111
      %s114 = sadd.s32 %s113, 1
      %p117 = scmp.eq.s32.totalorder %s16, 1
      %p118 = scmp.ne.s32.totalorder %s113, %s115
      %p119 = scmp.eq.s32.totalorder %s16, 0
      %p120 = por %p118, %p119
      %p121 = scmp.ne.s32.totalorder %s113, %s115
      %p122 = scmp.eq.s32.totalorder %s21, 1
      %p123 = por %p121, %p122
      %p124 = scmp.ne.s32.totalorder %s115, %s116
      %p125 = scmp.eq.s32.totalorder %s21, 0
      %p126 = por %p124, %p125
      %p127 = scmp.ne.s32.totalorder %s115, %s116
      %p128 = scmp.eq.s32.totalorder %s22, 1
      %p129 = por %p127, %p128
      %p131 = scmp.ne.s32.totalorder %s116, %s130
      %p132 = scmp.eq.s32.totalorder %s22, 0
      %p133 = por %p131, %p132
      %s134 = ssub.s32 %s23, %s35
      %s135 = ssub.s32 %s24, %s31
      %s136 = sor.u32 %s134, %s135
      %p137 = scmp.eq.s32.totalorder %s136, 0
      %s139 = sadd.s32 %s138, 1
      %s140 = scalar_select %p137, %s138, %s139
      %p143 = pneg %p137
      %p144 = scmp.eq.s32.totalorder %s16, 1
      %p145 = por %p143, %p144
      %p146 = scmp.ne.s32.totalorder %s138, %s141
      %p147 = scmp.eq.s32.totalorder %s16, 0
      %p148 = por %p146, %p147
      %p149 = scmp.ne.s32.totalorder %s138, %s141
      %p150 = scmp.eq.s32.totalorder %s21, 1
      %p151 = por %p149, %p150
      %p152 = scmp.ne.s32.totalorder %s141, %s142
      %p153 = scmp.eq.s32.totalorder %s21, 0
      %p154 = por %p152, %p153
      %p155 = scmp.ne.s32.totalorder %s141, %s142
      %p156 = scmp.eq.s32.totalorder %s22, 1
      %p157 = por %p155, %p156
      %p159 = scmp.ne.s32.totalorder %s142, %s158
      %p160 = scmp.eq.s32.totalorder %s22, 0
      %p161 = por %p159, %p160
      %p162 = scmp.le.s32.totalorder 1, %s16
      %p163 = scmp.lt.s32.totalorder %s16, 3
      %p164 = pnand %p162, %p163
      %p165 = pneg %p164
      // Predicated region
      $region9: #{tpu_custom_call.1} parent=5 // pred_check
        _
      $region10: #{tpu_custom_call.1} parent=5 // pred_check_branch
        %167 = sbr.rel (%p164) target = $region12
      $region11: #{tpu_custom_call.1} parent=5 // pred_region
        %s168 = ssub.s32 %s16, 1
        // Predicated region
        $region13: #{tpu_custom_call.1} parent=11 // pred_check
          %p169 = pneg %p105
        $region14: #{tpu_custom_call.1} parent=11 // pred_check_branch
          %171 = sbr.rel (%p169) target = $region16
        $region15: #{tpu_custom_call.1} parent=11 // pred_region
          _
        $region16: #{tpu_custom_call.1} parent=11 // pred_fallthru
          _
        // Predicated region
        $region17: #{tpu_custom_call.1} parent=11 // pred_check
          %p172 = pneg %p126
        $region18: #{tpu_custom_call.1} parent=11 // pred_check_branch
          %174 = sbr.rel (%p172) target = $region20
        $region19: #{tpu_custom_call.1} parent=11 // pred_region
          _
        $region20: #{tpu_custom_call.1} parent=11 // pred_fallthru
          _
      $region12: #{tpu_custom_call.1} parent=5 // pred_fallthru
        _
      %p175 = scmp.lt.s32.totalorder %s16, 2
      // Predicated region
      $region21: #{tpu_custom_call.1} parent=5 // pred_check
        %p176 = pneg %p175
      $region22: #{tpu_custom_call.1} parent=5 // pred_check_branch
        %178 = sbr.rel (%p176) target = $region24
      $region23: #{tpu_custom_call.1} parent=5 // pred_region
        // Predicated region
        $region25: #{tpu_custom_call.1} parent=23 // pred_check
          %p179 = pneg %p50
        $region26: #{tpu_custom_call.1} parent=23 // pred_check_branch
          %181 = sbr.rel (%p179) target = $region28
        $region27: #{tpu_custom_call.1} parent=23 // pred_region
          %s182 = sand.u32 %s40, 1
          %s183 = scalar_lea.sflag [#allocation3], %s182
          %s184 = sand.u32 %s40, 1
          %s185 = smul.addr %s184, 64
          %s186 = scalar_lea.vmem [#allocation2], %s185
          %s187 = smul.u32 2, %s24
          %189 = vsyncadd %s183, 0
          %s190 = smul.addr %s23, 8
          %s191 = sadd.s32 %s187, %s190
          %s192 = smul.addr %s191, 8
          %s193 = scalar_lea.hbm %s0, %s192
          %s194 = sshll.u32 %s193, 4
          %s195 = int_to_ptr.hbm [resolvable:$true] %s194
          %s196 = sshll.u32 %s186, 4
          %s197 = int_to_ptr.vmem [resolvable:$true] %s196
          %202 = dma.hbm_to_vmem [thread:$0]  %s195, 1024, %s197, %s183, 256, 256, 16
        $region28: #{tpu_custom_call.1} parent=23 // pred_fallthru
          _
        // Predicated region
        $region29: #{tpu_custom_call.1} parent=23 // pred_check
          %p203 = pneg %p78
        $region30: #{tpu_custom_call.1} parent=23 // pred_check_branch
          %205 = sbr.rel (%p203) target = $region32
        $region31: #{tpu_custom_call.1} parent=23 // pred_region
          %s206 = smul.u32 2, %s24
          %p207 = scmp.lt.s32.totalorder %s23, 1
          %s208 = scalar_select %p207, %s23, 1
          %p209 = scmp.lt.s32.totalorder %s206, 1
          %s210 = scalar_select %p209, %s206, 1
          %s211 = smul.addr %s208, 2
          %s212 = sadd.s32 %s210, %s211
          %s213 = smul.addr %s212, 8
          %s214 = scalar_lea.vmem %s1, %s213
          %s215 = smul.u32 2, %s24
        $region32: #{tpu_custom_call.1} parent=23 // pred_fallthru
          _
      $region24: #{tpu_custom_call.1} parent=5 // pred_fallthru
        _
      %p216 = scmp.le.s32.totalorder 1, %s16
      %p217 = scmp.lt.s32.totalorder %s16, 3
      %p218 = pnand %p216, %p217
      %p219 = pneg %p218
      // Predicated region
      $region33: #{tpu_custom_call.1} parent=5 // pred_check
        _
      $region34: #{tpu_custom_call.1} parent=5 // pred_check_branch
        %221 = sbr.rel (%p218) target = $region36
      $region35: #{tpu_custom_call.1} parent=5 // pred_region
        %s222 = ssub.s32 %s16, 1
        %s223 = sand.u32 %s43, 1
        %s224 = scalar_lea.sflag [#allocation3], %s223
        %s225 = sand.u32 %s43, 1
        %s226 = smul.addr %s225, 64
        %s227 = scalar_lea.vmem [#allocation2], %s226
        // Predicated region
        $region37: #{tpu_custom_call.1} parent=35 // pred_check
          %p228 = pneg %p56
        $region38: #{tpu_custom_call.1} parent=35 // pred_check_branch
          %230 = sbr.rel (%p228) target = $region40
        $region39: #{tpu_custom_call.1} parent=35 // pred_region
          %232 = dma.done %s224, 1024
        $region40: #{tpu_custom_call.1} parent=35 // pred_fallthru
          _
        %s233 = sand.u32 %s43, 1
        %s234 = scalar_lea.sflag [#allocation3], %s233
        %s235 = sand.u32 %s43, 1
        %s236 = smul.addr %s235, 64
        %s237 = scalar_lea.vmem [#allocation2], %s236
        %p238 = pneg %p56
        %p239 = pneg %p53
        %s240 = smul.u32 2, %s26
        %p241 = scmp.lt.s32.totalorder %s25, 1
        %s242 = scalar_select %p241, %s25, 1
        %p243 = scmp.lt.s32.totalorder %s240, 1
        %s244 = scalar_select %p243, %s240, 1
        %s245 = smul.addr %s242, 2
        %s246 = sadd.s32 %s244, %s245
        %s247 = smul.addr %s246, 8
        %s248 = scalar_lea.vmem %s1, %s247
        %p249 = pneg %p84
        %p250 = pneg %p81
        %p251 = pneg %p105
        %p252 = pneg %p102
        %p253 = pneg %p126
        %p254 = pneg %p123
        %p255 = pneg %p154
        %p256 = pneg %p151
        %s257 = sand.u32 %s141, 1
        %s258 = scalar_lea.sflag [#allocation4], %s257
        %s259 = sand.u32 %s141, 1
        %s260 = smul.addr %s259, 64
        %s261 = scalar_lea.vmem [#allocation5], %s260
        %s262 = smul.u32 2, %s26
        %s263 = smul.u32 2, %s26
        %p264 = scmp.lt.s32.totalorder %s25, 1
        %s265 = scalar_select %p264, %s25, 1
        %p266 = scmp.lt.s32.totalorder %s263, 1
        %s267 = scalar_select %p266, %s263, 1
        %s268 = smul.addr %s265, 2
        %s269 = sadd.s32 %s267, %s268
        %s270 = smul.addr %s269, 8
        %s271 = scalar_lea.vmem %s1, %s270
        %s272 = smul.u32 2, %s26
        %s273 = smul.u32 2, %s26
        %v274 = vld [vmem:[%s271] sm:$0xff]
        %v275 = vld [vmem:[%s271 + $0x8] sm:$0xff]
        %v276 = vld [vmem:[%s2] sm:$0xff]
        %v277 = vld [vmem:[%s2 + $0x8] sm:$0xff]
        %v278 = vld [vmem:[%s2 + $0x10] sm:$0xff]
        %v279 = vld [vmem:[%s2 + $0x18] sm:$0xff]
        %v280 = vld [vmem:[%s3] sm:$0xff]
        %v281 = vld [vmem:[%s3 + $0x8] sm:$0xff]
        %v282 = vld [vmem:[%s3 + $0x10] sm:$0xff]
        %v283 = vld [vmem:[%s3 + $0x18] sm:$0xff]
        %285 = vset.pattern.permute.xlu0 0
        %286 = vperm.xlu0 %285, %v280
        %v287 = vpop.permute.xlu0 %286
        %290 = vset.pattern.permute.xlu0 0
        %291 = vperm.xlu0 %290, %v281
        %v292 = vpop.permute.xlu0 %291
        %295 = vset.pattern.permute.xlu0 0
        %296 = vperm.xlu0 %295, %v282
        %v297 = vpop.permute.xlu0 %296
        %300 = vset.pattern.permute.xlu0 0
        %301 = vperm.xlu0 %300, %v283
        %v302 = vpop.permute.xlu0 %301
        %vm304 = vcmask 64512
        %v306 = vsel %vm304, %v276, 0
        %v309 = vsel %vm304, %v277, 0
        %v312 = vsel %vm304, %v278, 0
        %v315 = vsel %vm304, %v279, 0
        %317 = vmatpush.msra.mxu0 0.0
        %318 = vmatpush.msra.mxu0 0.0
        %319 = vmatpush.msra.mxu0 0.0
        %320 = vmatpush.msra.mxu0 0.0
        %321 = vmatpush.msra.mxu0 0.0
        %322 = vmatpush.msra.mxu0 0.0
        %323 = vmatpush.msra.mxu0 0.0
        %324 = vmatpush.msra.mxu0 0.0
        %325 = vmatpush.msra.mxu0 0.0
        %326 = vmatpush.msra.mxu0 0.0
        %327 = vmatpush.msra.mxu0 0.0
        %328 = vmatpush.msra.mxu0 0.0
        %329 = vmatpush.msra.mxu0 0.0
        %330 = vmatpush.msra.mxu0 0.0
        %331 = vmatpush.msra.mxu0 0.0
        %332 = vmatpush.msra.mxu0 %v274
        %333 = vmatmul.f32.gmra.mxu0 %v306
        %v334 = vpop.f32.mrf.mxu0
        %v335 = vadd.f32 %v287, %v334
        %336 = vmatmul.f32.gmra.mxu0 %v309
        %v337 = vpop.f32.mrf.mxu0
        %v338 = vadd.f32 %v292, %v337
        %339 = vmatmul.f32.gmra.mxu0 %v312
        %v340 = vpop.f32.mrf.mxu0
        %v341 = vadd.f32 %v297, %v340
        %342 = vmatmul.f32.gmra.mxu0 %v315
        %v343 = vpop.f32.mrf.mxu0
        %v344 = vadd.f32 %v302, %v343
        %345 = vdwg.mxu0
        %346 = vmatpush.msra.mxu0 0.0
        %347 = vmatpush.msra.mxu0 0.0
        %348 = vmatpush.msra.mxu0 0.0
        %349 = vmatpush.msra.mxu0 0.0
        %350 = vmatpush.msra.mxu0 0.0
        %351 = vmatpush.msra.mxu0 0.0
        %352 = vmatpush.msra.mxu0 0.0
        %353 = vmatpush.msra.mxu0 0.0
        %354 = vmatpush.msra.mxu0 0.0
        %355 = vmatpush.msra.mxu0 0.0
        %356 = vmatpush.msra.mxu0 0.0
        %357 = vmatpush.msra.mxu0 0.0
        %358 = vmatpush.msra.mxu0 0.0
        %359 = vmatpush.msra.mxu0 0.0
        %360 = vmatpush.msra.mxu0 0.0
        %361 = vmatpush.msra.mxu0 %v275
        %362 = vmatmul.f32.gmra.mxu0 %v306
        %v363 = vpop.f32.mrf.mxu0
        %v364 = vadd.f32 %v287, %v363
        %365 = vmatmul.f32.gmra.mxu0 %v309
        %v366 = vpop.f32.mrf.mxu0
        %v367 = vadd.f32 %v292, %v366
        %368 = vmatmul.f32.gmra.mxu0 %v312
        %v369 = vpop.f32.mrf.mxu0
        %v370 = vadd.f32 %v297, %v369
        %371 = vmatmul.f32.gmra.mxu0 %v315
        %v372 = vpop.f32.mrf.mxu0
        %v373 = vadd.f32 %v302, %v372
        %374 = vdwg.mxu0
        %v375 = vld [vmem:[%s227] sm:$0xff]
        %v376 = vld [vmem:[%s227 + $0x8] sm:$0xff]
        %v377 = vld [vmem:[%s227 + $0x10] sm:$0xff]
        %v378 = vld [vmem:[%s227 + $0x18] sm:$0xff]
        %v379 = vld [vmem:[%s227 + $0x20] sm:$0xff]
        %v380 = vld [vmem:[%s227 + $0x28] sm:$0xff]
        %v381 = vld [vmem:[%s227 + $0x30] sm:$0xff]
        %v382 = vld [vmem:[%s227 + $0x38] sm:$0xff]
        %v383 = vmul.f32 %v375, %v335
        %v384 = vmul.f32 %v376, %v364
        %v385 = vmul.f32 %v377, %v338
        %v386 = vmul.f32 %v378, %v367
        %v387 = vmul.f32 %v379, %v341
        %v388 = vmul.f32 %v380, %v370
        %v389 = vmul.f32 %v381, %v344
        %v390 = vmul.f32 %v382, %v373
        %391 = vst [vmem:[%s261] sm:$0xff] %v383
        %392 = vst [vmem:[%s261 + $0x8] sm:$0xff] %v384
        %393 = vst [vmem:[%s261 + $0x10] sm:$0xff] %v385
        %394 = vst [vmem:[%s261 + $0x18] sm:$0xff] %v386
        %395 = vst [vmem:[%s261 + $0x20] sm:$0xff] %v387
        %396 = vst [vmem:[%s261 + $0x28] sm:$0xff] %v388
        %397 = vst [vmem:[%s261 + $0x30] sm:$0xff] %v389
        %398 = vst [vmem:[%s261 + $0x38] sm:$0xff] %v390
        %s399 = sand.u32 %s141, 1
        %s400 = scalar_lea.sflag [#allocation4], %s399
        %s401 = sand.u32 %s141, 1
        %s402 = smul.addr %s401, 64
        %s403 = scalar_lea.vmem [#allocation5], %s402
        // Predicated region
        $region41: #{tpu_custom_call.1} parent=35 // pred_check
          %p404 = pneg %p151
        $region42: #{tpu_custom_call.1} parent=35 // pred_check_branch
          %406 = sbr.rel (%p404) target = $region44
        $region43: #{tpu_custom_call.1} parent=35 // pred_region
          %s407 = smul.u32 2, %s26
          %409 = vsyncadd %s400, 0
          %s410 = smul.addr %s25, 8
          %s411 = sadd.s32 %s407, %s410
          %s412 = smul.addr %s411, 8
          %s413 = scalar_lea.hbm %s4, %s412
          %s414 = sshll.u32 %s403, 4
          %s415 = int_to_ptr.vmem [resolvable:$true] %s414
          %s416 = sshll.u32 %s413, 4
          %s417 = int_to_ptr.hbm [resolvable:$true] %s416
          %422 = dma.vmem_to_hbm [thread:$0]  %s415, 1024, %s417, %s400, 256, 256, 16
        $region44: #{tpu_custom_call.1} parent=35 // pred_fallthru
          _
      $region36: #{tpu_custom_call.1} parent=5 // pred_fallthru
        _
      %p423 = scmp.le.s32.totalorder 2, %s16
      // Predicated region
      $region45: #{tpu_custom_call.1} parent=5 // pred_check
        %p424 = pneg %p423
      $region46: #{tpu_custom_call.1} parent=5 // pred_check_branch
        %426 = sbr.rel (%p424) target = $region48
      $region47: #{tpu_custom_call.1} parent=5 // pred_region
        %s427 = ssub.s32 %s16, 2
        // Predicated region
        $region49: #{tpu_custom_call.1} parent=47 // pred_check
          %p428 = pneg %p157
        $region50: #{tpu_custom_call.1} parent=47 // pred_check_branch
          %430 = sbr.rel (%p428) target = $region52
        $region51: #{tpu_custom_call.1} parent=47 // pred_region
          %s431 = sand.u32 %s142, 1
          %s432 = scalar_lea.sflag [#allocation4], %s431
          %s433 = sand.u32 %s142, 1
          %s434 = smul.addr %s433, 64
          %s435 = scalar_lea.vmem [#allocation5], %s434
          %437 = dma.done %s432, 1024
        $region52: #{tpu_custom_call.1} parent=47 // pred_fallthru
          _
      $region48: #{tpu_custom_call.1} parent=5 // pred_fallthru
        _
    $region6: #{tpu_custom_call.1} parent=1 // loop_footer
      %s20 = sadd.s32 1, %s16
    $region7: #{tpu_custom_call.1} parent=1 // loop_footer_branch
      %15 = sbr.rel target = $region3
    $region8: #{tpu_custom_call.1} parent=1 // loop_exit
      _
    %438 = vsyncpa [#allocation3], 1
    %s439 = scalar_lea.sflag [#allocation3], 1
    %440 = vsyncpa %s439, 1
    %441 = vsyncpa [#allocation4], 1
    %s442 = scalar_lea.sflag [#allocation4], 1
    %443 = vsyncpa %s442, 1

</llo_original>
